<compile_context>
chip_gen: v5e
topology: v5e:2x2
jax: 0.10.0
libtpu: 0.0.40
codegen_flags: <defaults>
</compile_context>

<pallas_src>
import jax
import jax.numpy as jnp
from jax.experimental import pallas as pl
from jax.experimental.pallas import tpu as pltpu


def _posemb_kernel(emb_ref, out_ref):
    # emb_ref: (b, depth, 128)   out_ref: (b, depth, tile_hw), tile_hw % 128 == 0
    emb = emb_ref[...]                       # one vreg-aligned load
    reps = out_ref.shape[-1] // 128          # static python int -> full unroll
    for k in range(reps):
        out_ref[:, :, k * 128:(k + 1) * 128] = emb


def _round_up(x, m):
    return (x + m - 1) // m * m


def _chip_policy():
    """(min_grid_steps, per-output-block VMEM byte budget) for this chip."""
    min_steps = 2          # safe default: lets v7x's 2 TCs split the writeback,
    out_budget = 12 << 20  # ~neutral on single-TC chips; 2x12 MiB double-buffer
    try:
        vmem = int(pltpu.get_tpu_info().vmem_capacity_bytes)
        if vmem >= (128 << 20):      # v5e / v6e: single TensorCore, 128 MiB VMEM
            min_steps = 1            # prefer one big block (no per-step overhead)
            out_budget = 14 << 20
    except Exception:
        pass
    return min_steps, out_budget


def _pick_tiling(hw, b, depth, itemsize, *, min_steps, out_budget_bytes,
                 max_tile_lanes=2048):
    """Lane-dense pixel tile + padded pixel extent.

    Returns (tile_hw, hw_padded) with tile_hw % 128 == 0, hw_padded % tile_hw == 0,
    and b*depth*tile_hw*itemsize <= out_budget_bytes (double-buffered by Pallas).
    """
    hw128 = _round_up(hw, 128)
    bytes_per_lane = b * depth * itemsize
    by_bytes = max(128, (out_budget_bytes // bytes_per_lane) // 128 * 128)
    tile = min(hw128, by_bytes, max_tile_lanes)
    if min_steps > 1 and hw128 >= min_steps * 128:
        tile = min(tile, max(128, (hw128 // min_steps) // 128 * 128))
    tile = max(tile, 128)
    hw_padded = _round_up(hw, tile)
    return tile, hw_padded


def positional_embedding_learned(table, shape):
    """table: (num_embeddings, depth) float; shape: (b, c, h, w) python ints.

    Returns (b, depth, h, w) in table's dtype, matching the module's forward.
    """
    b, _c, h, w = (int(s) for s in shape)
    num_emb, depth = table.shape
    assert b <= num_emb, "batch index exceeds embedding table size (10)"
    hw = h * w

    dtype = table.dtype
    itemsize = jnp.dtype(dtype).itemsize

    min_steps, out_budget = _chip_policy()
    tile_hw, hw_padded = _pick_tiling(
        hw, b, depth, itemsize, min_steps=min_steps, out_budget_bytes=out_budget)
    grid = (hw_padded // tile_hw,)

    # index = arange(b) -> just the leading rows. Pre-broadcast to a full
    # 128-lane vreg so the kernel never does a cross-lane splat.
    rows = jnp.broadcast_to(table[:b][:, :, None], (b, depth, 128)).astype(dtype)

    # Scoped-VMEM request from actual block bytes + headroom (never the full
    # physical VMEM of a v7x core).
    out_block_bytes = b * depth * tile_hw * itemsize
    in_block_bytes = b * depth * 128 * itemsize
    needed = 2 * (out_block_bytes + in_block_bytes) + (4 << 20)
    vmem_limit = int(min(max(needed, 24 << 20), 40 << 20))

    out = pl.pallas_call(
        _posemb_kernel,
        out_shape=jax.ShapeDtypeStruct((b, depth, hw_padded), dtype),
        grid_spec=pltpu.PrefetchScalarGridSpec(
            num_scalar_prefetch=0,
            grid=grid,
            in_specs=[
                # Constant block: embedding rows stay resident in VMEM.
                pl.BlockSpec((b, depth, 128), lambda j: (0, 0, 0)),
            ],
            out_specs=pl.BlockSpec((b, depth, tile_hw), lambda j: (0, 0, j)),
        ),
        compiler_params=pltpu.CompilerParams(
            # Independent output tiles -> parallel (lets v7x use both TCs).
            dimension_semantics=("parallel",),
            vmem_limit_bytes=vmem_limit,
        ),
    )(rows)

    if hw_padded != hw:
        out = out[:, :, :hw]
    return out.reshape(b, depth, h, w)


def reference_positional_embedding(table, shape):
    """Pure-JAX reference mirroring the PyTorch module."""
    b, _c, h, w = (int(s) for s in shape)
    depth = table.shape[1]
    pos = table[:b]                                          # (b, depth)
    return jnp.broadcast_to(pos[:, :, None, None], (b, depth, h, w))


if __name__ == "__main__":
    depth = 128
    b, c, h, w = 2, 4, 16, 16

    key = jax.random.PRNGKey(0)
    # nn.Embedding initializes its weight from N(0, 1).
    table = jax.random.normal(key, (10, depth), jnp.float32)

    out = positional_embedding_learned(table, (b, c, h, w))
    out = jax.block_until_ready(out)

    ref = jax.block_until_ready(
        reference_positional_embedding(table, (b, c, h, w)))

    assert out.shape == (b, depth, h, w), out.shape
    assert jnp.allclose(out, ref, rtol=0.0, atol=0.0), (
        out.ravel()[:4], ref.ravel()[:4])

    # Exercise a non-multiple-of-128 spatial size to cover the padding path.
    out2 = jax.block_until_ready(positional_embedding_learned(table, (3, 4, 10, 10)))
    ref2 = reference_positional_embedding(table, (3, 4, 10, 10))
    assert out2.shape == (3, depth, 10, 10), out2.shape
    assert jnp.allclose(out2, ref2, rtol=0.0, atol=0.0)

    print("KERNEL_OK")
</pallas_src>

<mosaic_0001>
module attributes {stable_mosaic.version = 11 : i64} {
  func.func @_posemb_kernel(%arg0: i32, %arg1: memref<2x128x128xf32, #tpu.memory_space<vmem>>, %arg2: memref<2x128x128xf32, #tpu.memory_space<vmem>>) attributes {dimension_semantics = [#tpu.dimension_semantics<parallel>], iteration_bounds = array<i64: 2>, scalar_prefetch = 0 : i64, scratch_operands = 0 : i64, tpu.core_type = #tpu.core_type<tc>, window_params = [{pipeline_mode = #tpu.pipeline_mode<synchronous>, transform_indices = @transform_0, window_bounds = array<i64: 2, 128, 128>}, {transform_indices = @transform_1, window_bounds = array<i64: 2, 128, 128>}]} {
    %c0 = arith.constant 0 : index
    %c0_0 = arith.constant 0 : index
    %c0_1 = arith.constant 0 : index
    %0 = vector.load %arg1[%c0, %c0_0, %c0_1] : memref<2x128x128xf32, #tpu.memory_space<vmem>>, vector<2x128x128xf32>
    %c0_2 = arith.constant 0 : index
    %c0_3 = arith.constant 0 : index
    %c0_4 = arith.constant 0 : index
    %1 = vector.load %arg2[%c0_2, %c0_3, %c0_4] : memref<2x128x128xf32, #tpu.memory_space<vmem>>, vector<2x128x128xf32>
    tpu.vector_store %arg2[%c0_2, %c0_3, %c0_4], %0 {strides = array<i32>} : memref<2x128x128xf32, #tpu.memory_space<vmem>>, vector<2x128x128xf32>,
    return
  }
  func.func @transform_0(%arg0: i32) -> (i32, i32, i32) {
    %c0_i32 = arith.constant 0 : i32
    %c0_i32_0 = arith.constant 0 : i32
    %c0_i32_1 = arith.constant 0 : i32
    %c0_i32_2 = arith.constant 0 : i32
    return %c0_i32, %c0_i32_0, %c0_i32_1 : i32, i32, i32
  }
  func.func @transform_1(%arg0: i32) -> (i32, i32, i32) {
    %c0_i32 = arith.constant 0 : i32
    %c0_i32_0 = arith.constant 0 : i32
    %c0_i32_1 = arith.constant 0 : i32
    return %c0_i32, %c0_i32_0, %arg0 : i32, i32, i32
  }
}

</mosaic_0001>

<llo_original>
// kernel: tpu_custom_call.1
$region0: #{tpu_custom_call.1}
  #allocation0 [shape = 'u32[]', space=smem, size = 0x4, offset = 0x4, fixed_abs, tag = 'smem constant byte address 0x4 - core index']
  #allocation1 [shape = 'u32[72,128]{1,0:T(1,128)}', space=vmem, size = 0x9000, scoped, tag = 'internal scratch']
  %s0 = inlined_call_operand.hbm [shape: f32[2,128,128], index: 0, kind: input, shape index: {}]
  %s1 = inlined_call_operand.hbm [shape: f32[2,128,256], index: 1, kind: output, shape index: {}]
  %s2 = sld [smem:[#allocation0]]
  $region41: #{tpu_custom_call.1} parent=0
    _
  %s4 = ssub.s32 1, %s2
  %s5 = scalar_select 0, %s4, %s2
  $region1: #{tpu_custom_call.1} parent=0
    #allocation2 [shape = 'u8[131072]{0}', space=vmem, size = 0x20000, scoped, tag = 'input window, operand 0, single buffered']
    #allocation3 [shape = 's32[2]{0}', space=sflag, size = 0x8, scoped, tag = 'scoped memory for tpu_custom_call.1']
    #allocation4 [shape = 's32[2]{0}', space=sflag, size = 0x8, scoped, tag = 'scoped memory for tpu_custom_call.1']
    #allocation5 [shape = 'u8[262144]{0}', space=vmem, size = 0x40000, scoped, tag = 'output window, operand 0']
    %6 = vsyncpa [#allocation3], 0
    %7 = vsyncpa [#allocation4], 0
    %s8 = scalar_lea.sflag [#allocation4], 1
    %9 = vsyncpa %s8, 0
    loop: start=0, step=1, limit=4
    $region2: #{tpu_custom_call.1} parent=1 // loop_pre_header
      _
    $region3: #{tpu_custom_call.1} parent=1 // loop_header
      %s11 = sphi 0, %s15
      %p12 = scmp.ge.s32.totalorder %s11, 4
      %s19 = sphi 0, %s19
      %s21 = sphi 0, %s19
      %s22 = sphi 0, %s21
      %s36 = sphi 0, %s22
      %s42 = sphi 0, %s44
      %s45 = sphi 0, %s42
      %s46 = sphi 0, %s45
      %s62 = sphi 0, %s46
    $region4: #{tpu_custom_call.1} parent=1 // loop_header_branch
      %14 = sbr.rel (%p12) target = $region8
    $region5: #{tpu_custom_call.1} parent=1 // loop_body
      %s16 = ssub.s32 %s11, 1
      %s17 = ssub.s32 %s11, 2
      %s18 = sadd.s32 %s11, 1
      %s20 = sadd.s32 %s19, 1
      %p23 = scmp.eq.s32.totalorder %s11, 1
      %p24 = scmp.ne.s32.totalorder %s19, %s21
      %p25 = scmp.eq.s32.totalorder %s11, 0
      %p26 = por %p24, %p25
      %p27 = scmp.ne.s32.totalorder %s19, %s21
      %p28 = scmp.eq.s32.totalorder %s16, 1
      %p29 = por %p27, %p28
      %p30 = scmp.ne.s32.totalorder %s21, %s22
      %p31 = scmp.eq.s32.totalorder %s16, 0
      %p32 = por %p30, %p31
      %p33 = scmp.ne.s32.totalorder %s21, %s22
      %p34 = scmp.eq.s32.totalorder %s17, 1
      %p35 = por %p33, %p34
      %p37 = scmp.ne.s32.totalorder %s22, %s36
      %p38 = scmp.eq.s32.totalorder %s17, 0
      %p39 = por %p37, %p38
      %s40 = ssub.s32 %s11, %s18
      %p41 = scmp.eq.s32.totalorder %s40, 0
      %s43 = sadd.s32 %s42, 1
      %s44 = scalar_select %p41, %s42, %s43
      %p47 = pneg %p41
      %p48 = scmp.eq.s32.totalorder %s11, 1
      %p49 = por %p47, %p48
      %p50 = scmp.ne.s32.totalorder %s42, %s45
      %p51 = scmp.eq.s32.totalorder %s11, 0
      %p52 = por %p50, %p51
      %p53 = scmp.ne.s32.totalorder %s42, %s45
      %p54 = scmp.eq.s32.totalorder %s16, 1
      %p55 = por %p53, %p54
      %p56 = scmp.ne.s32.totalorder %s45, %s46
      %p57 = scmp.eq.s32.totalorder %s16, 0
      %p58 = por %p56, %p57
      %p59 = scmp.ne.s32.totalorder %s45, %s46
      %p60 = scmp.eq.s32.totalorder %s17, 1
      %p61 = por %p59, %p60
      %p63 = scmp.ne.s32.totalorder %s46, %s62
      %p64 = scmp.eq.s32.totalorder %s17, 0
      %p65 = por %p63, %p64
      %p66 = scmp.le.s32.totalorder 1, %s11
      %p67 = scmp.lt.s32.totalorder %s11, 3
      %p68 = pnand %p66, %p67
      %p69 = pneg %p68
      // Predicated region
      $region9: #{tpu_custom_call.1} parent=5 // pred_check
        _
      $region10: #{tpu_custom_call.1} parent=5 // pred_check_branch
        %71 = sbr.rel (%p68) target = $region12
      $region11: #{tpu_custom_call.1} parent=5 // pred_region
        %s72 = ssub.s32 %s11, 1
        // Predicated region
        $region13: #{tpu_custom_call.1} parent=11 // pred_check
          %p73 = pneg %p32
        $region14: #{tpu_custom_call.1} parent=11 // pred_check_branch
          %75 = sbr.rel (%p73) target = $region16
        $region15: #{tpu_custom_call.1} parent=11 // pred_region
          %77 = vsyncadd [#allocation3], 0
          %s78 = sshll.u32 %s0, 4
          %s79 = int_to_ptr.hbm [resolvable:$true] %s78
          %s80 = sshll.u32 [#allocation2], 4
          %s81 = int_to_ptr.vmem [resolvable:$true] %s80
          %86 = dma.hbm_to_vmem [thread:$0]  %s79, 4096, %s81, [#allocation3], 128, 128, 8
        $region16: #{tpu_custom_call.1} parent=11 // pred_fallthru
          _
      $region12: #{tpu_custom_call.1} parent=5 // pred_fallthru
        _
      %p87 = scmp.lt.s32.totalorder %s11, 2
      // Predicated region
      $region17: #{tpu_custom_call.1} parent=5 // pred_check
        %p88 = pneg %p87
      $region18: #{tpu_custom_call.1} parent=5 // pred_check_branch
        %90 = sbr.rel (%p88) target = $region20
      $region19: #{tpu_custom_call.1} parent=5 // pred_region
        _
      $region20: #{tpu_custom_call.1} parent=5 // pred_fallthru
        _
      %p91 = scmp.le.s32.totalorder 1, %s11
      %p92 = scmp.lt.s32.totalorder %s11, 3
      %p93 = pnand %p91, %p92
      %p94 = pneg %p93
      // Predicated region
      $region21: #{tpu_custom_call.1} parent=5 // pred_check
        _
      $region22: #{tpu_custom_call.1} parent=5 // pred_check_branch
        %96 = sbr.rel (%p93) target = $region24
      $region23: #{tpu_custom_call.1} parent=5 // pred_region
        %s97 = ssub.s32 %s11, 1
        // Predicated region
        $region25: #{tpu_custom_call.1} parent=23 // pred_check
          %p98 = pneg %p32
        $region26: #{tpu_custom_call.1} parent=23 // pred_check_branch
          %100 = sbr.rel (%p98) target = $region28
        $region27: #{tpu_custom_call.1} parent=23 // pred_region
          %102 = dma.done [#allocation3], 4096
        $region28: #{tpu_custom_call.1} parent=23 // pred_fallthru
          _
        %p103 = pneg %p32
        %p104 = pneg %p29
        %p105 = pneg %p58
        %p106 = pneg %p55
        %s107 = sand.u32 %s45, 1
        %s108 = scalar_lea.sflag [#allocation4], %s107
        %s109 = sand.u32 %s45, 1
        %s110 = smul.addr %s109, 256
        %s111 = scalar_lea.vmem [#allocation5], %s110
        %v112 = vld [vmem:[#allocation2] sm:$0xff]
        %v113 = vld [vmem:[#allocation2 + $0x8] sm:$0xff]
        %v114 = vld [vmem:[#allocation2 + $0x10] sm:$0xff]
        %v115 = vld [vmem:[#allocation2 + $0x18] sm:$0xff]
        %v116 = vld [vmem:[#allocation2 + $0x20] sm:$0xff]
        %v117 = vld [vmem:[#allocation2 + $0x28] sm:$0xff]
        %v118 = vld [vmem:[#allocation2 + $0x30] sm:$0xff]
        %v119 = vld [vmem:[#allocation2 + $0x38] sm:$0xff]
        %v120 = vld [vmem:[#allocation2 + $0x40] sm:$0xff]
        %v121 = vld [vmem:[#allocation2 + $0x48] sm:$0xff]
        %v122 = vld [vmem:[#allocation2 + $0x50] sm:$0xff]
        %v123 = vld [vmem:[#allocation2 + $0x58] sm:$0xff]
        %v124 = vld [vmem:[#allocation2 + $0x60] sm:$0xff]
        %v125 = vld [vmem:[#allocation2 + $0x68] sm:$0xff]
        %v126 = vld [vmem:[#allocation2 + $0x70] sm:$0xff]
        %v127 = vld [vmem:[#allocation2 + $0x78] sm:$0xff]
        %v128 = vld [vmem:[#allocation2 + $0x80] sm:$0xff]
        %v129 = vld [vmem:[#allocation2 + $0x88] sm:$0xff]
        %v130 = vld [vmem:[#allocation2 + $0x90] sm:$0xff]
        %v131 = vld [vmem:[#allocation2 + $0x98] sm:$0xff]
        %v132 = vld [vmem:[#allocation2 + $0xa0] sm:$0xff]
        %v133 = vld [vmem:[#allocation2 + $0xa8] sm:$0xff]
        %v134 = vld [vmem:[#allocation2 + $0xb0] sm:$0xff]
        %v135 = vld [vmem:[#allocation2 + $0xb8] sm:$0xff]
        %v136 = vld [vmem:[#allocation2 + $0xc0] sm:$0xff]
        %v137 = vld [vmem:[#allocation2 + $0xc8] sm:$0xff]
        %v138 = vld [vmem:[#allocation2 + $0xd0] sm:$0xff]
        %v139 = vld [vmem:[#allocation2 + $0xd8] sm:$0xff]
        %v140 = vld [vmem:[#allocation2 + $0xe0] sm:$0xff]
        %v141 = vld [vmem:[#allocation2 + $0xe8] sm:$0xff]
        %v142 = vld [vmem:[#allocation2 + $0xf0] sm:$0xff]
        %v143 = vld [vmem:[#allocation2 + $0xf8] sm:$0xff]
        %144 = vst [vmem:[%s111] sm:$0xff] %v112
        %145 = vst [vmem:[%s111 + $0x8] sm:$0xff] %v113
        %146 = vst [vmem:[%s111 + $0x10] sm:$0xff] %v114
        %147 = vst [vmem:[%s111 + $0x18] sm:$0xff] %v115
        %148 = vst [vmem:[%s111 + $0x20] sm:$0xff] %v116
        %149 = vst [vmem:[%s111 + $0x28] sm:$0xff] %v117
        %150 = vst [vmem:[%s111 + $0x30] sm:$0xff] %v118
        %151 = vst [vmem:[%s111 + $0x38] sm:$0xff] %v119
        %152 = vst [vmem:[%s111 + $0x40] sm:$0xff] %v120
        %153 = vst [vmem:[%s111 + $0x48] sm:$0xff] %v121
        %154 = vst [vmem:[%s111 + $0x50] sm:$0xff] %v122
        %155 = vst [vmem:[%s111 + $0x58] sm:$0xff] %v123
        %156 = vst [vmem:[%s111 + $0x60] sm:$0xff] %v124
        %157 = vst [vmem:[%s111 + $0x68] sm:$0xff] %v125
        %158 = vst [vmem:[%s111 + $0x70] sm:$0xff] %v126
        %159 = vst [vmem:[%s111 + $0x78] sm:$0xff] %v127
        %160 = vst [vmem:[%s111 + $0x80] sm:$0xff] %v128
        %161 = vst [vmem:[%s111 + $0x88] sm:$0xff] %v129
        %162 = vst [vmem:[%s111 + $0x90] sm:$0xff] %v130
        %163 = vst [vmem:[%s111 + $0x98] sm:$0xff] %v131
        %164 = vst [vmem:[%s111 + $0xa0] sm:$0xff] %v132
        %165 = vst [vmem:[%s111 + $0xa8] sm:$0xff] %v133
        %166 = vst [vmem:[%s111 + $0xb0] sm:$0xff] %v134
        %167 = vst [vmem:[%s111 + $0xb8] sm:$0xff] %v135
        %168 = vst [vmem:[%s111 + $0xc0] sm:$0xff] %v136
        %169 = vst [vmem:[%s111 + $0xc8] sm:$0xff] %v137
        %170 = vst [vmem:[%s111 + $0xd0] sm:$0xff] %v138
        %171 = vst [vmem:[%s111 + $0xd8] sm:$0xff] %v139
        %172 = vst [vmem:[%s111 + $0xe0] sm:$0xff] %v140
        %173 = vst [vmem:[%s111 + $0xe8] sm:$0xff] %v141
        %174 = vst [vmem:[%s111 + $0xf0] sm:$0xff] %v142
        %175 = vst [vmem:[%s111 + $0xf8] sm:$0xff] %v143
        %s176 = sand.u32 %s45, 1
        %s177 = scalar_lea.sflag [#allocation4], %s176
        %s178 = sand.u32 %s45, 1
        %s179 = smul.addr %s178, 256
        %s180 = scalar_lea.vmem [#allocation5], %s179
        // Predicated region
        $region29: #{tpu_custom_call.1} parent=23 // pred_check
          %p181 = pneg %p55
        $region30: #{tpu_custom_call.1} parent=23 // pred_check_branch
          %183 = sbr.rel (%p181) target = $region32
        $region31: #{tpu_custom_call.1} parent=23 // pred_region
          %185 = vsyncadd %s177, 0
          %s186 = smul.addr %s16, 8
          %s187 = scalar_lea.hbm %s1, %s186
          %s188 = sshll.u32 %s180, 4
          %s189 = int_to_ptr.vmem [resolvable:$true] %s188
          %s190 = sshll.u32 %s187, 4
          %s191 = int_to_ptr.hbm [resolvable:$true] %s190
          %196 = dma.vmem_to_hbm [thread:$0]  %s189, 4096, %s191, %s177, 128, 256, 8
        $region32: #{tpu_custom_call.1} parent=23 // pred_fallthru
          _
      $region24: #{tpu_custom_call.1} parent=5 // pred_fallthru
        _
      %p197 = scmp.le.s32.totalorder 2, %s11
      // Predicated region
      $region33: #{tpu_custom_call.1} parent=5 // pred_check
        %p198 = pneg %p197
      $region34: #{tpu_custom_call.1} parent=5 // pred_check_branch
        %200 = sbr.rel (%p198) target = $region36
      $region35: #{tpu_custom_call.1} parent=5 // pred_region
        %s201 = ssub.s32 %s11, 2
        // Predicated region
        $region37: #{tpu_custom_call.1} parent=35 // pred_check
          %p202 = pneg %p61
        $region38: #{tpu_custom_call.1} parent=35 // pred_check_branch
          %204 = sbr.rel (%p202) target = $region40
        $region39: #{tpu_custom_call.1} parent=35 // pred_region
          %s205 = sand.u32 %s46, 1
          %s206 = scalar_lea.sflag [#allocation4], %s205
          %s207 = sand.u32 %s46, 1
          %s208 = smul.addr %s207, 256
          %s209 = scalar_lea.vmem [#allocation5], %s208
          %211 = dma.done %s206, 4096
        $region40: #{tpu_custom_call.1} parent=35 // pred_fallthru
          _
      $region36: #{tpu_custom_call.1} parent=5 // pred_fallthru
        _
    $region6: #{tpu_custom_call.1} parent=1 // loop_footer
      %s15 = sadd.s32 1, %s11
    $region7: #{tpu_custom_call.1} parent=1 // loop_footer_branch
      %10 = sbr.rel target = $region3
    $region8: #{tpu_custom_call.1} parent=1 // loop_exit
      _
    %212 = vsyncpa [#allocation3], 1
    %s213 = scalar_lea.sflag [#allocation3], 1
    %214 = vsyncpa %s213, 1
    %215 = vsyncpa [#allocation4], 1
    %s216 = scalar_lea.sflag [#allocation4], 1
    %217 = vsyncpa %s216, 1

</llo_original>
